<compile_context>
chip_gen: v7x
topology: tpu7x:2x2x1
jax: 0.10.0
libtpu: 0.0.40
codegen_flags: <defaults>
</compile_context>

<pallas_src>
import functools

import jax
import jax.numpy as jnp
from jax import lax
from jax.experimental import pallas as pl
from jax.experimental.pallas import tpu as pltpu

_LANES = 128


def _round_up(x, m):
    return ((x + m - 1) // m) * m


# ----------------------------- Pallas kernel ---------------------------------
def _make_temporal_conv_kernel(Kt, Tp, Np, c_out, C_conv, act_func, enable_gated):
    """Per-batch kernel body. All sizes / modes are static Python values."""
    TpNp = Tp * Np

    def kernel(x_ref, w_ref, b_ref, o_ref):
        x = x_ref[0]                                      # (c_in, T*Np), lanes = time*vertex

        # Causal conv, channel-major: weight is LHS, big lane dim is the MXU N dim.
        # Align residual is already folded into w_ref[Kt-1] / b_ref by the wrapper.
        conv = jnp.dot(w_ref[0], x[:, 0:TpNp],
                       preferred_element_type=jnp.float32)
        for kt in range(1, Kt):                           # 128-aligned lane slices
            conv = conv + jnp.dot(w_ref[kt], x[:, kt * Np:kt * Np + TpNp],
                                  preferred_element_type=jnp.float32)
        conv = conv + b_ref[...]                          # (C_conv, Tp*Np)

        if enable_gated:
            x_p = conv[:c_out]                            # residual already inside x_p
            x_q = conv[c_out:]
            if act_func == "glu":
                out = x_p * jax.nn.sigmoid(x_q)
            else:  # "gtu"
                out = jnp.tanh(x_p) * jax.nn.sigmoid(x_q)
        else:
            z = conv                                      # conv + x_in (folded)
            if act_func == "sigmoid":
                out = jax.nn.sigmoid(z)
            elif act_func == "tanh":
                out = jnp.tanh(z)
            elif act_func == "relu":
                out = jnp.maximum(z, 0.0)
            elif act_func == "leaky_relu":
                out = jnp.where(z >= 0, z, 0.01 * z)
            elif act_func == "elu":
                # clamp before exp: cheaper on the EUP, no overflow on large positive z
                out = jnp.where(z >= 0, z, jnp.exp(jnp.minimum(z, 0.0)) - 1.0)
            else:
                raise NotImplementedError(f"act_func={act_func}")

        o_ref[0] = out.astype(o_ref.dtype)                # (c_out, Tp*Np), channel-major

    return kernel


# ------------------------------- wrapper --------------------------------------
def temporal_conv_forward(x, params, *, Kt, c_out, act_func="glu",
                          enable_gated=True):
    """x: (B, c_in, T, N) float32 (PyTorch NCHW). Returns (B, c_out, T-Kt+1, N)."""
    B, c_in, T, N = x.shape
    Tp = T - Kt + 1
    wc, bc = params["conv_w"], params["conv_b"]   # (C_conv, c_in, Kt, 1), (C_conv,)
    C_conv = wc.shape[0]

    if enable_gated:
        assert act_func in ("glu", "gtu"), act_func
        assert C_conv == 2 * c_out, (
            f"gated path requires conv out channels == 2*c_out, got {C_conv} vs {2*c_out}")
    else:
        assert C_conv == c_out, (C_conv, c_out)
        if act_func == "linear":
            # TODO(synk): non-gated 'linear' act (nn.Linear over n_vertex) not wired in.
            raise NotImplementedError("act_func='linear' path not implemented")

    # Pad vertices so the lane dim is 128-aligned: per-kt lane slices inside the kernel
    # are aligned and the output store is an unmasked vst. Padding is sliced off after.
    Np = _round_up(N, _LANES)
    if Np != N:
        x = jnp.pad(x, ((0, 0), (0, 0), (0, 0), (0, Np - N)))
    x_flat = x.reshape(B, c_in, T * Np)           # free contiguous reshape, stays NCHW

    # Conv weight (C_conv, c_in, Kt, 1) -> per-tap LHS (Kt, C_conv, c_in); bias (C_conv,1).
    w_k = jnp.transpose(wc[:, :, :, 0], (2, 0, 1)).astype(jnp.float32)
    b_k = bc.reshape(C_conv, 1).astype(jnp.float32)

    # Fold the Align residual (a linear map of x at times Kt-1:) into tap Kt-1 + bias.
    if c_in > c_out:                                # 1x1 align conv
        wal = params["align_w"][:, :, 0, 0].astype(jnp.float32)    # (c_out, c_in)
        bal = params["align_b"].astype(jnp.float32)                # (c_out,)
        res_w = jnp.zeros((C_conv, c_in), jnp.float32).at[:c_out].set(wal)
        b_k = b_k.at[:c_out, 0].add(bal)
    else:                                           # zero-pad (c_in<c_out) or identity
        res_w = jnp.zeros((C_conv, c_in), jnp.float32).at[:c_in, :c_in].set(
            jnp.eye(c_in, dtype=jnp.float32))
    w_k = w_k.at[Kt - 1].add(res_w)

    kernel = _make_temporal_conv_kernel(Kt, Tp, Np, c_out, C_conv,
                                        act_func, enable_gated)

    # Explicit VMEM hint: >= v5e's 16 MiB default scoped limit, <= v7x's 64 MiB physical.
    per_step_bytes = 4 * (c_in * T * Np + c_out * Tp * Np + 3 * C_conv * Tp * Np)
    vmem_limit = int(min(64 * 1024 * 1024,
                         max(32 * 1024 * 1024, 4 * per_step_bytes)))

    out_flat = pl.pallas_call(
        kernel,
        out_shape=jax.ShapeDtypeStruct((B, c_out, Tp * Np), x.dtype),
        grid=(B,),
        in_specs=[
            pl.BlockSpec((1, c_in, T * Np), lambda b: (b, 0, 0)),
            pl.BlockSpec((Kt, C_conv, c_in), lambda b: (0, 0, 0)),
            pl.BlockSpec((C_conv, 1), lambda b: (0, 0)),
        ],
        out_specs=pl.BlockSpec((1, c_out, Tp * Np), lambda b: (b, 0, 0)),
        compiler_params=pltpu.CompilerParams(
            dimension_semantics=("parallel",),
            vmem_limit_bytes=vmem_limit),
    )(x_flat, w_k, b_k)

    # Free contiguous reshape back to NCHW; drop the vertex padding.
    out = out_flat.reshape(B, c_out, Tp, Np)
    if Np != N:
        out = out[:, :, :, :N]
    return out


# --------------------------- pure-JAX reference --------------------------------
def reference_forward(x, params, *, Kt, c_out, act_func, enable_gated):
    B, c_in, T, N = x.shape
    if c_in > c_out:
        wal, bal = params["align_w"], params["align_b"]
        x_al = lax.conv_general_dilated(
            x, wal, window_strides=(1, 1), padding="VALID",
            dimension_numbers=("NCHW", "OIHW", "NCHW")) + bal[None, :, None, None]
    elif c_in < c_out:
        x_al = jnp.concatenate(
            [x, jnp.zeros((B, c_out - c_in, T, N), x.dtype)], axis=1)
    else:
        x_al = x
    x_in = x_al[:, :, Kt - 1:, :]

    conv = lax.conv_general_dilated(
        x, params["conv_w"], window_strides=(1, 1), padding="VALID",
        dimension_numbers=("NCHW", "OIHW", "NCHW")) \
        + params["conv_b"][None, :, None, None]

    if enable_gated:
        x_p, x_q = conv[:, :c_out], conv[:, -c_out:]
        if act_func == "glu":
            return (x_p + x_in) * jax.nn.sigmoid(x_q)
        return jnp.tanh(x_p + x_in) * jax.nn.sigmoid(x_q)
    z = conv + x_in
    if act_func == "sigmoid":
        return jax.nn.sigmoid(z)
    if act_func == "tanh":
        return jnp.tanh(z)
    if act_func == "relu":
        return jnp.maximum(z, 0.0)
    if act_func == "leaky_relu":
        return jnp.where(z >= 0, z, 0.01 * z)
    if act_func == "elu":
        return jnp.where(z >= 0, z, jnp.exp(z) - 1.0)
    raise NotImplementedError(act_func)


# --------------------------------- main ----------------------------------------
if __name__ == "__main__":
    key = jax.random.PRNGKey(0)
    B, T, N, Kt = 2, 8, 16, 3

    def make_params(k, c_in, c_out, enable_gated):
        ks = jax.random.split(k, 4)
        C_conv = 2 * c_out if enable_gated else c_out
        p = {
            "conv_w": 0.1 * jax.random.normal(ks[0], (C_conv, c_in, Kt, 1), jnp.float32),
            "conv_b": 0.1 * jax.random.normal(ks[1], (C_conv,), jnp.float32),
        }
        if c_in > c_out:
            p["align_w"] = 0.1 * jax.random.normal(ks[2], (c_out, c_in, 1, 1), jnp.float32)
            p["align_b"] = 0.1 * jax.random.normal(ks[3], (c_out,), jnp.float32)
        return p

    configs = [
        dict(c_in=4,  c_out=8, act_func="glu",  enable_gated=True),   # pad Align
        dict(c_in=12, c_out=8, act_func="gtu",  enable_gated=True),   # 1x1 conv Align
        dict(c_in=8,  c_out=8, act_func="relu", enable_gated=False),  # identity Align
        dict(c_in=8,  c_out=8, act_func="elu",  enable_gated=False),  # identity Align
    ]

    for cfg in configs:
        kp, kx, key = jax.random.split(key, 3)
        params = make_params(kp, cfg["c_in"], cfg["c_out"], cfg["enable_gated"])
        x = jax.random.normal(kx, (B, cfg["c_in"], T, N), jnp.float32)

        run = jax.jit(functools.partial(
            temporal_conv_forward, Kt=Kt, c_out=cfg["c_out"],
            act_func=cfg["act_func"], enable_gated=cfg["enable_gated"]))
        out = jax.block_until_ready(run(x, params))
        ref = reference_forward(x, params, Kt=Kt, c_out=cfg["c_out"],
                                act_func=cfg["act_func"],
                                enable_gated=cfg["enable_gated"])

        assert out.shape == (B, cfg["c_out"], T - Kt + 1, N), out.shape
        err = float(jnp.max(jnp.abs(out - ref)))
        assert jnp.allclose(out, ref, atol=2e-5, rtol=2e-5), (cfg, err)

    print("KERNEL_OK")
</pallas_src>

<mosaic_0001>
module attributes {stable_mosaic.version = 11 : i64} {
  func.func @kernel(%arg0: i32, %arg1: memref<1x4x1024xf32, #tpu.memory_space<vmem>>, %arg2: memref<3x16x4xf32, #tpu.memory_space<vmem>>, %arg3: memref<16x1xf32, #tpu.memory_space<vmem>>, %arg4: memref<1x8x768xf32, #tpu.memory_space<vmem>>) attributes {dimension_semantics = [#tpu.dimension_semantics<parallel>], iteration_bounds = array<i64: 2>, scalar_prefetch = 0 : i64, scratch_operands = 0 : i64, tpu.core_type = #tpu.core_type<tc>, window_params = [{transform_indices = @transform_0, window_bounds = array<i64: 1, 4, 1024>}, {pipeline_mode = #tpu.pipeline_mode<synchronous>, transform_indices = @transform_1, window_bounds = array<i64: 3, 16, 4>}, {pipeline_mode = #tpu.pipeline_mode<synchronous>, transform_indices = @transform_2, window_bounds = array<i64: 16, 1>}, {transform_indices = @transform_3, window_bounds = array<i64: 1, 8, 768>}]} {
    %c0 = arith.constant 0 : index
    %c0_0 = arith.constant 0 : index
    %c0_1 = arith.constant 0 : index
    %0 = vector.load %arg1[%c0, %c0_0, %c0_1] : memref<1x4x1024xf32, #tpu.memory_space<vmem>>, vector<1x4x1024xf32>
    %1 = vector.shape_cast %0 : vector<1x4x1024xf32> to vector<4x1024xf32>
    %c0_2 = arith.constant 0 : index
    %c0_3 = arith.constant 0 : index
    %c0_4 = arith.constant 0 : index
    %2 = vector.load %arg2[%c0_2, %c0_3, %c0_4] : memref<3x16x4xf32, #tpu.memory_space<vmem>>, vector<1x16x4xf32>
    %3 = vector.shape_cast %2 : vector<1x16x4xf32> to vector<16x4xf32>
    %4 = vector.extract_strided_slice %1 {offsets = [0, 0], sizes = [4, 768], strides = [1, 1]} : vector<4x1024xf32> to vector<4x768xf32>
    %cst = arith.constant dense<0.000000e+00> : vector<16x768xf32>
    %5 = tpu.matmul %3, %4, %cst {dimension_numbers = #tpu.dot_dimension_numbers<[1], [0], [0], [1], [0, 0, 1, 1], [], []>} : vector<16x4xf32>, vector<4x768xf32>, vector<16x768xf32> -> vector<16x768xf32>
    %c1 = arith.constant 1 : index
    %c0_5 = arith.constant 0 : index
    %c0_6 = arith.constant 0 : index
    %6 = vector.load %arg2[%c1, %c0_5, %c0_6] : memref<3x16x4xf32, #tpu.memory_space<vmem>>, vector<1x16x4xf32>
    %7 = vector.shape_cast %6 : vector<1x16x4xf32> to vector<16x4xf32>
    %8 = vector.extract_strided_slice %1 {offsets = [0, 128], sizes = [4, 768], strides = [1, 1]} : vector<4x1024xf32> to vector<4x768xf32>
    %cst_7 = arith.constant dense<0.000000e+00> : vector<16x768xf32>
    %9 = tpu.matmul %7, %8, %cst_7 {dimension_numbers = #tpu.dot_dimension_numbers<[1], [0], [0], [1], [0, 0, 1, 1], [], []>} : vector<16x4xf32>, vector<4x768xf32>, vector<16x768xf32> -> vector<16x768xf32>
    %10 = arith.addf %5, %9 : vector<16x768xf32>
    %c2 = arith.constant 2 : index
    %c0_8 = arith.constant 0 : index
    %c0_9 = arith.constant 0 : index
    %11 = vector.load %arg2[%c2, %c0_8, %c0_9] : memref<3x16x4xf32, #tpu.memory_space<vmem>>, vector<1x16x4xf32>
    %12 = vector.shape_cast %11 : vector<1x16x4xf32> to vector<16x4xf32>
    %13 = vector.extract_strided_slice %1 {offsets = [0, 256], sizes = [4, 768], strides = [1, 1]} : vector<4x1024xf32> to vector<4x768xf32>
    %cst_10 = arith.constant dense<0.000000e+00> : vector<16x768xf32>
    %14 = tpu.matmul %12, %13, %cst_10 {dimension_numbers = #tpu.dot_dimension_numbers<[1], [0], [0], [1], [0, 0, 1, 1], [], []>} : vector<16x4xf32>, vector<4x768xf32>, vector<16x768xf32> -> vector<16x768xf32>
    %15 = arith.addf %10, %14 : vector<16x768xf32>
    %c0_11 = arith.constant 0 : index
    %c0_12 = arith.constant 0 : index
    %16 = vector.load %arg3[%c0_11, %c0_12] : memref<16x1xf32, #tpu.memory_space<vmem>>, vector<16x1xf32>
    %17 = vector.broadcast %16 : vector<16x1xf32> to vector<16x768xf32>
    %18 = arith.addf %15, %17 : vector<16x768xf32>
    %19 = vector.extract_strided_slice %18 {offsets = [0, 0], sizes = [8, 768], strides = [1, 1]} : vector<16x768xf32> to vector<8x768xf32>
    %20 = vector.extract_strided_slice %18 {offsets = [8, 0], sizes = [8, 768], strides = [1, 1]} : vector<16x768xf32> to vector<8x768xf32>
    %21 = arith.negf %20 : vector<8x768xf32>
    %22 = math.exp %21 : vector<8x768xf32>
    %cst_13 = arith.constant 1.000000e+00 : f32
    %23 = vector.broadcast %cst_13 : f32 to vector<8x768xf32>
    %24 = arith.addf %23, %22 : vector<8x768xf32>
    %25 = arith.divf %23, %24 : vector<8x768xf32>
    %26 = arith.mulf %19, %25 : vector<8x768xf32>
    %c0_14 = arith.constant 0 : index
    %c0_15 = arith.constant 0 : index
    %c0_16 = arith.constant 0 : index
    %27 = vector.load %arg4[%c0_14, %c0_15, %c0_16] : memref<1x8x768xf32, #tpu.memory_space<vmem>>, vector<1x8x768xf32>
    %28 = vector.shape_cast %27 : vector<1x8x768xf32> to vector<8x768xf32>
    %29 = vector.shape_cast %26 : vector<8x768xf32> to vector<1x8x768xf32>
    tpu.vector_store %arg4[%c0_14, %c0_15, %c0_16], %29 {strides = array<i32>} : memref<1x8x768xf32, #tpu.memory_space<vmem>>, vector<1x8x768xf32>,
    return
  }
  func.func @transform_0(%arg0: i32) -> (i32, i32, i32) {
    %c0_i32 = arith.constant 0 : i32
    %c0_i32_0 = arith.constant 0 : i32
    %c0_i32_1 = arith.constant 0 : i32
    return %arg0, %c0_i32, %c0_i32_0 : i32, i32, i32
  }
  func.func @transform_1(%arg0: i32) -> (i32, i32, i32) {
    %c0_i32 = arith.constant 0 : i32
    %c0_i32_0 = arith.constant 0 : i32
    %c0_i32_1 = arith.constant 0 : i32
    %c0_i32_2 = arith.constant 0 : i32
    return %c0_i32, %c0_i32_0, %c0_i32_1 : i32, i32, i32
  }
  func.func @transform_2(%arg0: i32) -> (i32, i32) {
    %c0_i32 = arith.constant 0 : i32
    %c0_i32_0 = arith.constant 0 : i32
    %c0_i32_1 = arith.constant 0 : i32
    return %c0_i32, %c0_i32_0 : i32, i32
  }
  func.func @transform_3(%arg0: i32) -> (i32, i32, i32) {
    %c0_i32 = arith.constant 0 : i32
    %c0_i32_0 = arith.constant 0 : i32
    %c0_i32_1 = arith.constant 0 : i32
    return %arg0, %c0_i32, %c0_i32_0 : i32, i32, i32
  }
}

</mosaic_0001>

<llo_original>
// kernel: temporal_conv_forward.1
$region0: #{temporal_conv_forward.1}
  #allocation0 [shape = 'u32[]', space=smem, size = 0x4, offset = 0x4, fixed_abs, tag = 'smem constant byte address 0x4 - core index']
  #allocation1 [shape = 'u32[144,128]{1,0:T(1,128)}', space=vmem, size = 0x12000, scoped, tag = 'internal scratch']
  %s0 = inlined_call_operand.vmem [shape: f32[2,4,1024], index: 0, kind: input, shape index: {}]
  %s1 = inlined_call_operand.vmem [shape: f32[3,16,4], index: 1, kind: input, shape index: {}]
  %s2 = inlined_call_operand.vmem [shape: f32[16,1], index: 2, kind: input, shape index: {}]
  %s3 = inlined_call_operand.hbm [shape: f32[2,8,768], index: 3, kind: output, shape index: {}]
  %s4 = sld [smem:[#allocation0]]
  $region45: #{temporal_conv_forward.1} parent=0
    _
  %s6 = ssub.s32 1, %s4
  %s7 = scalar_select 0, %s6, %s4
  $region1: #{temporal_conv_forward.1} parent=0
    #allocation2 [shape = 'u8[49152]{0}', space=vmem, size = 0xc000, scoped, tag = 'output window, operand 0']
    #allocation3 [shape = 's32[2]{0}', space=sflag, size = 0x8, scoped, tag = 'scoped memory for temporal_conv_forward.1']
    %8 = vsyncpa [#allocation3], 0
    %s9 = scalar_lea.sflag [#allocation3], 1
    %10 = vsyncpa %s9, 0
    loop: start=0, step=1, limit=4
    $region2: #{temporal_conv_forward.1} parent=1 // loop_pre_header
      _
    $region3: #{temporal_conv_forward.1} parent=1 // loop_header
      %s12 = sphi 0, %s16
      %p13 = scmp.ge.s32.totalorder %s12, 4
      %s22 = sphi 0, %s24
      %s25 = sphi 0, %s22
      %s26 = sphi 0, %s25
      %s42 = sphi 0, %s26
      %s46 = sphi 0, %s46
      %s48 = sphi 0, %s46
      %s49 = sphi 0, %s48
      %s63 = sphi 0, %s49
      %s67 = sphi 0, %s67
      %s69 = sphi 0, %s67
      %s70 = sphi 0, %s69
      %s84 = sphi 0, %s70
      %s90 = sphi 0, %s92
      %s93 = sphi 0, %s90
      %s94 = sphi 0, %s93
      %s110 = sphi 0, %s94
    $region4: #{temporal_conv_forward.1} parent=1 // loop_header_branch
      %15 = sbr.rel (%p13) target = $region8
    $region5: #{temporal_conv_forward.1} parent=1 // loop_body
      %s17 = ssub.s32 %s12, 1
      %s18 = ssub.s32 %s12, 2
      %s19 = sadd.s32 %s12, 1
      %s20 = ssub.s32 %s12, %s19
      %p21 = scmp.eq.s32.totalorder %s20, 0
      %s23 = sadd.s32 %s22, 1
      %s24 = scalar_select %p21, %s22, %s23
      %p27 = pneg %p21
      %p28 = scmp.eq.s32.totalorder %s12, 1
      %p29 = por %p27, %p28
      %p30 = scmp.ne.s32.totalorder %s22, %s25
      %p31 = scmp.eq.s32.totalorder %s12, 0
      %p32 = por %p30, %p31
      %p33 = scmp.ne.s32.totalorder %s22, %s25
      %p34 = scmp.eq.s32.totalorder %s17, 1
      %p35 = por %p33, %p34
      %p36 = scmp.ne.s32.totalorder %s25, %s26
      %p37 = scmp.eq.s32.totalorder %s17, 0
      %p38 = por %p36, %p37
      %p39 = scmp.ne.s32.totalorder %s25, %s26
      %p40 = scmp.eq.s32.totalorder %s18, 1
      %p41 = por %p39, %p40
      %p43 = scmp.ne.s32.totalorder %s26, %s42
      %p44 = scmp.eq.s32.totalorder %s18, 0
      %p45 = por %p43, %p44
      %s47 = sadd.s32 %s46, 1
      %p50 = scmp.eq.s32.totalorder %s12, 1
      %p51 = scmp.ne.s32.totalorder %s46, %s48
      %p52 = scmp.eq.s32.totalorder %s12, 0
      %p53 = por %p51, %p52
      %p54 = scmp.ne.s32.totalorder %s46, %s48
      %p55 = scmp.eq.s32.totalorder %s17, 1
      %p56 = por %p54, %p55
      %p57 = scmp.ne.s32.totalorder %s48, %s49
      %p58 = scmp.eq.s32.totalorder %s17, 0
      %p59 = por %p57, %p58
      %p60 = scmp.ne.s32.totalorder %s48, %s49
      %p61 = scmp.eq.s32.totalorder %s18, 1
      %p62 = por %p60, %p61
      %p64 = scmp.ne.s32.totalorder %s49, %s63
      %p65 = scmp.eq.s32.totalorder %s18, 0
      %p66 = por %p64, %p65
      %s68 = sadd.s32 %s67, 1
      %p71 = scmp.eq.s32.totalorder %s12, 1
      %p72 = scmp.ne.s32.totalorder %s67, %s69
      %p73 = scmp.eq.s32.totalorder %s12, 0
      %p74 = por %p72, %p73
      %p75 = scmp.ne.s32.totalorder %s67, %s69
      %p76 = scmp.eq.s32.totalorder %s17, 1
      %p77 = por %p75, %p76
      %p78 = scmp.ne.s32.totalorder %s69, %s70
      %p79 = scmp.eq.s32.totalorder %s17, 0
      %p80 = por %p78, %p79
      %p81 = scmp.ne.s32.totalorder %s69, %s70
      %p82 = scmp.eq.s32.totalorder %s18, 1
      %p83 = por %p81, %p82
      %p85 = scmp.ne.s32.totalorder %s70, %s84
      %p86 = scmp.eq.s32.totalorder %s18, 0
      %p87 = por %p85, %p86
      %s88 = ssub.s32 %s12, %s19
      %p89 = scmp.eq.s32.totalorder %s88, 0
      %s91 = sadd.s32 %s90, 1
      %s92 = scalar_select %p89, %s90, %s91
      %p95 = pneg %p89
      %p96 = scmp.eq.s32.totalorder %s12, 1
      %p97 = por %p95, %p96
      %p98 = scmp.ne.s32.totalorder %s90, %s93
      %p99 = scmp.eq.s32.totalorder %s12, 0
      %p100 = por %p98, %p99
      %p101 = scmp.ne.s32.totalorder %s90, %s93
      %p102 = scmp.eq.s32.totalorder %s17, 1
      %p103 = por %p101, %p102
      %p104 = scmp.ne.s32.totalorder %s93, %s94
      %p105 = scmp.eq.s32.totalorder %s17, 0
      %p106 = por %p104, %p105
      %p107 = scmp.ne.s32.totalorder %s93, %s94
      %p108 = scmp.eq.s32.totalorder %s18, 1
      %p109 = por %p107, %p108
      %p111 = scmp.ne.s32.totalorder %s94, %s110
      %p112 = scmp.eq.s32.totalorder %s18, 0
      %p113 = por %p111, %p112
      %p114 = scmp.le.s32.totalorder 1, %s12
      %p115 = scmp.lt.s32.totalorder %s12, 3
      %p116 = pnand %p114, %p115
      %p117 = pneg %p116
      // Predicated region
      $region9: #{temporal_conv_forward.1} parent=5 // pred_check
        _
      $region10: #{temporal_conv_forward.1} parent=5 // pred_check_branch
        %119 = sbr.rel (%p116) target = $region12
      $region11: #{temporal_conv_forward.1} parent=5 // pred_region
        %s120 = ssub.s32 %s12, 1
        // Predicated region
        $region13: #{temporal_conv_forward.1} parent=11 // pred_check
          %p121 = pneg %p59
        $region14: #{temporal_conv_forward.1} parent=11 // pred_check_branch
          %123 = sbr.rel (%p121) target = $region16
        $region15: #{temporal_conv_forward.1} parent=11 // pred_region
          _
        $region16: #{temporal_conv_forward.1} parent=11 // pred_fallthru
          _
        // Predicated region
        $region17: #{temporal_conv_forward.1} parent=11 // pred_check
          %p124 = pneg %p80
        $region18: #{temporal_conv_forward.1} parent=11 // pred_check_branch
          %126 = sbr.rel (%p124) target = $region20
        $region19: #{temporal_conv_forward.1} parent=11 // pred_region
          _
        $region20: #{temporal_conv_forward.1} parent=11 // pred_fallthru
          _
      $region12: #{temporal_conv_forward.1} parent=5 // pred_fallthru
        _
      %p127 = scmp.lt.s32.totalorder %s12, 2
      // Predicated region
      $region21: #{temporal_conv_forward.1} parent=5 // pred_check
        %p128 = pneg %p127
      $region22: #{temporal_conv_forward.1} parent=5 // pred_check_branch
        %130 = sbr.rel (%p128) target = $region24
      $region23: #{temporal_conv_forward.1} parent=5 // pred_region
        // Predicated region
        $region25: #{temporal_conv_forward.1} parent=23 // pred_check
          %p131 = pneg %p32
        $region26: #{temporal_conv_forward.1} parent=23 // pred_check_branch
          %133 = sbr.rel (%p131) target = $region28
        $region27: #{temporal_conv_forward.1} parent=23 // pred_region
          %p134 = scmp.lt.s32.totalorder %s12, 1
          %s135 = scalar_select %p134, %s12, 1
          %s136 = smul.addr %s135, 8
          %s137 = smul.addr %s136, 4
          %s138 = scalar_lea.vmem %s0, %s137
        $region28: #{temporal_conv_forward.1} parent=23 // pred_fallthru
          _
      $region24: #{temporal_conv_forward.1} parent=5 // pred_fallthru
        _
      %p139 = scmp.le.s32.totalorder 1, %s12
      %p140 = scmp.lt.s32.totalorder %s12, 3
      %p141 = pnand %p139, %p140
      %p142 = pneg %p141
      // Predicated region
      $region29: #{temporal_conv_forward.1} parent=5 // pred_check
        _
      $region30: #{temporal_conv_forward.1} parent=5 // pred_check_branch
        %144 = sbr.rel (%p141) target = $region32
      $region31: #{temporal_conv_forward.1} parent=5 // pred_region
        %s145 = ssub.s32 %s12, 1
        %p146 = scmp.lt.s32.totalorder %s17, 1
        %s147 = scalar_select %p146, %s17, 1
        %s148 = smul.addr %s147, 8
        %s149 = smul.addr %s148, 4
        %s150 = scalar_lea.vmem %s0, %s149
        %p151 = pneg %p38
        %p152 = pneg %p35
        %p153 = pneg %p59
        %p154 = pneg %p56
        %p155 = pneg %p80
        %p156 = pneg %p77
        %p157 = pneg %p106
        %p158 = pneg %p103
        %s159 = sand.u32 %s93, 1
        %s160 = scalar_lea.sflag [#allocation3], %s159
        %s161 = sand.u32 %s93, 1
        %s162 = smul.addr %s161, 48
        %s163 = scalar_lea.vmem [#allocation2], %s162
        %p164 = scmp.lt.s32.totalorder %s17, 1
        %s165 = scalar_select %p164, %s17, 1
        %s166 = smul.addr %s165, 8
        %s167 = smul.addr %s166, 4
        %s168 = scalar_lea.vmem %s0, %s167
        %v169 = vld [vmem:[%s168] sm:$0xff]
        %v170 = vld [vmem:[%s168 + $0x8] sm:$0xff]
        %v171 = vld [vmem:[%s168 + $0x10] sm:$0xff]
        %v172 = vld [vmem:[%s168 + $0x18] sm:$0xff]
        %v173 = vld [vmem:[%s1] sm:$0xff]
        %v174 = vld [vmem:[%s1 + $0x8] sm:$0xff]
        %s175 = scalar_lea.vmem %s1, 16
        %v176 = vld [vmem:[%s175] sm:$0xff]
        %v177 = vld [vmem:[%s175 + $0x8] sm:$0xff]
        %v182 = vcombine.high %v169, %v169
        %v183 = vcombine.high %v170, %v170
        %v184 = vcombine.high %v171, %v171
        %vm185 = vcmask 31744
        %v187 = vsel %vm185, %v176, 0
        %v190 = vsel %vm185, %v177, 0
        %vm192 = vcmask 1043456
        %v193 = vsel %vm192, %v182, 0
        %v195 = vsel %vm192, %v170, 0
        %v197 = vsel %vm192, %v183, 0
        %v199 = vsel %vm192, %v171, 0
        %v201 = vsel %vm192, %v184, 0
        %v203 = vsel %vm192, %v172, 0
        %205 = vmatprep.subr.mxu0 %v195
        %206 = vmatpush1.msra.mxu0 %v193
        %207 = vmatprep.subr.mxu0 0.0
        %208 = vmatpush1.msra.mxu0 0.0
        %209 = vmatprep.subr.mxu0 0.0
        %210 = vmatpush1.msra.mxu0 0.0
        %211 = vmatprep.subr.mxu0 0.0
        %212 = vmatpush1.msra.mxu0 0.0
        %213 = vmatprep.subr.mxu0 0.0
        %214 = vmatpush1.msra.mxu0 0.0
        %215 = vmatprep.subr.mxu0 0.0
        %216 = vmatpush1.msra.mxu0 0.0
        %217 = vmatprep.subr.mxu0 0.0
        %218 = vmatpush1.msra.mxu0 0.0
        %219 = vmatprep.subr.mxu0 0.0
        %220 = vmatpush1.msra.mxu0 0.0
        %221 = vmatprep.subr.mxu0 0.0
        %222 = vmatpush1.msra.mxu0 0.0
        %223 = vmatprep.subr.mxu0 0.0
        %224 = vmatpush1.msra.mxu0 0.0
        %225 = vmatprep.subr.mxu0 0.0
        %226 = vmatpush1.msra.mxu0 0.0
        %227 = vmatprep.subr.mxu0 0.0
        %228 = vmatpush1.msra.mxu0 0.0
        %229 = vmatprep.subr.mxu0 0.0
        %230 = vmatpush1.msra.mxu0 0.0
        %231 = vmatprep.subr.mxu0 0.0
        %232 = vmatpush1.msra.mxu0 0.0
        %233 = vmatprep.subr.mxu0 0.0
        %234 = vmatpush1.msra.mxu0 0.0
        %235 = vmatprep.subr.mxu0 0.0
        %236 = vmatpush1.msra.mxu0 0.0
        %237 = vmatprep.subr.mxu0 0.0
        %238 = vmatpush1.msra.mxu0 0.0
        %239 = vmatprep.subr.mxu0 0.0
        %240 = vmatpush1.msra.mxu0 0.0
        %241 = vmatprep.subr.mxu0 0.0
        %242 = vmatpush1.msra.mxu0 0.0
        %243 = vmatprep.subr.mxu0 0.0
        %244 = vmatpush1.msra.mxu0 0.0
        %245 = vmatprep.subr.mxu0 0.0
        %246 = vmatpush1.msra.mxu0 0.0
        %247 = vmatprep.subr.mxu0 0.0
        %248 = vmatpush1.msra.mxu0 0.0
        %249 = vmatprep.subr.mxu0 0.0
        %250 = vmatpush1.msra.mxu0 0.0
        %251 = vmatprep.subr.mxu0 0.0
        %252 = vmatpush1.msra.mxu0 0.0
        %253 = vmatprep.subr.mxu0 0.0
        %254 = vmatpush1.msra.mxu0 0.0
        %255 = vmatprep.subr.mxu0 0.0
        %256 = vmatpush1.msra.mxu0 0.0
        %257 = vmatprep.subr.mxu0 0.0
        %258 = vmatpush1.msra.mxu0 0.0
        %259 = vmatprep.subr.mxu0 0.0
        %260 = vmatpush1.msra.mxu0 0.0
        %261 = vmatprep.subr.mxu0 0.0
        %262 = vmatpush1.msra.mxu0 0.0
        %263 = vmatprep.subr.mxu0 0.0
        %264 = vmatpush1.msra.mxu0 0.0
        %265 = vmatprep.subr.mxu0 0.0
        %266 = vmatpush1.msra.mxu0 0.0
        %267 = vmatprep.subr.mxu0 0.0
        %268 = vmatpush1.msra.mxu0 0.0
        %269 = vmatprep.mubr.f32.mxu0 0.0
        %270 = vmatmul.mubr.f32.gmra.mrb[0].mxu0 %v187
        %v271 = vpop.f32.mrb[0].mxu0
        %v272 = vadd.f32 0.0, %v271
        %v273 = vpop.f32.mrb[0].mxu0
        %v274 = vadd.f32 0.0, %v273
        %275 = vmatprep.mubr.f32.mxu0 0.0
        %276 = vmatmul.mubr.f32.gmra.mrb[0].mxu0 %v190
        %v277 = vpop.f32.mrb[0].mxu0
        %v278 = vadd.f32 0.0, %v277
        %v279 = vpop.f32.mrb[0].mxu0
        %v280 = vadd.f32 0.0, %v279
        %281 = vdwg.mxu0
        %282 = vmatprep.subr.mxu0 %v199
        %283 = vmatpush1.msra.mxu0 %v197
        %284 = vmatprep.subr.mxu0 0.0
        %285 = vmatpush1.msra.mxu0 0.0
        %286 = vmatprep.subr.mxu0 0.0
        %287 = vmatpush1.msra.mxu0 0.0
        %288 = vmatprep.subr.mxu0 0.0
        %289 = vmatpush1.msra.mxu0 0.0
        %290 = vmatprep.subr.mxu0 0.0
        %291 = vmatpush1.msra.mxu0 0.0
        %292 = vmatprep.subr.mxu0 0.0
        %293 = vmatpush1.msra.mxu0 0.0
        %294 = vmatprep.subr.mxu0 0.0
        %295 = vmatpush1.msra.mxu0 0.0
        %296 = vmatprep.subr.mxu0 0.0
        %297 = vmatpush1.msra.mxu0 0.0
        %298 = vmatprep.subr.mxu0 0.0
        %299 = vmatpush1.msra.mxu0 0.0
        %300 = vmatprep.subr.mxu0 0.0
        %301 = vmatpush1.msra.mxu0 0.0
        %302 = vmatprep.subr.mxu0 0.0
        %303 = vmatpush1.msra.mxu0 0.0
        %304 = vmatprep.subr.mxu0 0.0
        %305 = vmatpush1.msra.mxu0 0.0
        %306 = vmatprep.subr.mxu0 0.0
        %307 = vmatpush1.msra.mxu0 0.0
        %308 = vmatprep.subr.mxu0 0.0
        %309 = vmatpush1.msra.mxu0 0.0
        %310 = vmatprep.subr.mxu0 0.0
        %311 = vmatpush1.msra.mxu0 0.0
        %312 = vmatprep.subr.mxu0 0.0
        %313 = vmatpush1.msra.mxu0 0.0
        %314 = vmatprep.subr.mxu0 0.0
        %315 = vmatpush1.msra.mxu0 0.0
        %316 = vmatprep.subr.mxu0 0.0
        %317 = vmatpush1.msra.mxu0 0.0
        %318 = vmatprep.subr.mxu0 0.0
        %319 = vmatpush1.msra.mxu0 0.0
        %320 = vmatprep.subr.mxu0 0.0
        %321 = vmatpush1.msra.mxu0 0.0
        %322 = vmatprep.subr.mxu0 0.0
        %323 = vmatpush1.msra.mxu0 0.0
        %324 = vmatprep.subr.mxu0 0.0
        %325 = vmatpush1.msra.mxu0 0.0
        %326 = vmatprep.subr.mxu0 0.0
        %327 = vmatpush1.msra.mxu0 0.0
        %328 = vmatprep.subr.mxu0 0.0
        %329 = vmatpush1.msra.mxu0 0.0
        %330 = vmatprep.subr.mxu0 0.0
        %331 = vmatpush1.msra.mxu0 0.0
        %332 = vmatprep.subr.mxu0 0.0
        %333 = vmatpush1.msra.mxu0 0.0
        %334 = vmatprep.subr.mxu0 0.0
        %335 = vmatpush1.msra.mxu0 0.0
        %336 = vmatprep.subr.mxu0 0.0
        %337 = vmatpush1.msra.mxu0 0.0
        %338 = vmatprep.subr.mxu0 0.0
        %339 = vmatpush1.msra.mxu0 0.0
        %340 = vmatprep.subr.mxu0 0.0
        %341 = vmatpush1.msra.mxu0 0.0
        %342 = vmatprep.subr.mxu0 0.0
        %343 = vmatpush1.msra.mxu0 0.0
        %344 = vmatprep.subr.mxu0 0.0
        %345 = vmatpush1.msra.mxu0 0.0
        %346 = vmatprep.mubr.f32.mxu0 0.0
        %347 = vmatmul.mubr.f32.gmra.mrb[0].mxu0 %v187
        %v348 = vpop.f32.mrb[0].mxu0
        %v349 = vadd.f32 0.0, %v348
        %v350 = vpop.f32.mrb[0].mxu0
        %v351 = vadd.f32 0.0, %v350
        %352 = vmatprep.mubr.f32.mxu0 0.0
        %353 = vmatmul.mubr.f32.gmra.mrb[0].mxu0 %v190
        %v354 = vpop.f32.mrb[0].mxu0
        %v355 = vadd.f32 0.0, %v354
        %v356 = vpop.f32.mrb[0].mxu0
        %v357 = vadd.f32 0.0, %v356
        %358 = vdwg.mxu0
        %359 = vmatprep.subr.mxu0 %v203
        %360 = vmatpush1.msra.mxu0 %v201
        %361 = vmatprep.subr.mxu0 0.0
        %362 = vmatpush1.msra.mxu0 0.0
        %363 = vmatprep.subr.mxu0 0.0
        %364 = vmatpush1.msra.mxu0 0.0
        %365 = vmatprep.subr.mxu0 0.0
        %366 = vmatpush1.msra.mxu0 0.0
        %367 = vmatprep.subr.mxu0 0.0
        %368 = vmatpush1.msra.mxu0 0.0
        %369 = vmatprep.subr.mxu0 0.0
        %370 = vmatpush1.msra.mxu0 0.0
        %371 = vmatprep.subr.mxu0 0.0
        %372 = vmatpush1.msra.mxu0 0.0
        %373 = vmatprep.subr.mxu0 0.0
        %374 = vmatpush1.msra.mxu0 0.0
        %375 = vmatprep.subr.mxu0 0.0
        %376 = vmatpush1.msra.mxu0 0.0
        %377 = vmatprep.subr.mxu0 0.0
        %378 = vmatpush1.msra.mxu0 0.0
        %379 = vmatprep.subr.mxu0 0.0
        %380 = vmatpush1.msra.mxu0 0.0
        %381 = vmatprep.subr.mxu0 0.0
        %382 = vmatpush1.msra.mxu0 0.0
        %383 = vmatprep.subr.mxu0 0.0
        %384 = vmatpush1.msra.mxu0 0.0
        %385 = vmatprep.subr.mxu0 0.0
        %386 = vmatpush1.msra.mxu0 0.0
        %387 = vmatprep.subr.mxu0 0.0
        %388 = vmatpush1.msra.mxu0 0.0
        %389 = vmatprep.subr.mxu0 0.0
        %390 = vmatpush1.msra.mxu0 0.0
        %391 = vmatprep.subr.mxu0 0.0
        %392 = vmatpush1.msra.mxu0 0.0
        %393 = vmatprep.subr.mxu0 0.0
        %394 = vmatpush1.msra.mxu0 0.0
        %395 = vmatprep.subr.mxu0 0.0
        %396 = vmatpush1.msra.mxu0 0.0
        %397 = vmatprep.subr.mxu0 0.0
        %398 = vmatpush1.msra.mxu0 0.0
        %399 = vmatprep.subr.mxu0 0.0
        %400 = vmatpush1.msra.mxu0 0.0
        %401 = vmatprep.subr.mxu0 0.0
        %402 = vmatpush1.msra.mxu0 0.0
        %403 = vmatprep.subr.mxu0 0.0
        %404 = vmatpush1.msra.mxu0 0.0
        %405 = vmatprep.subr.mxu0 0.0
        %406 = vmatpush1.msra.mxu0 0.0
        %407 = vmatprep.subr.mxu0 0.0
        %408 = vmatpush1.msra.mxu0 0.0
        %409 = vmatprep.subr.mxu0 0.0
        %410 = vmatpush1.msra.mxu0 0.0
        %411 = vmatprep.subr.mxu0 0.0
        %412 = vmatpush1.msra.mxu0 0.0
        %413 = vmatprep.subr.mxu0 0.0
        %414 = vmatpush1.msra.mxu0 0.0
        %415 = vmatprep.subr.mxu0 0.0
        %416 = vmatpush1.msra.mxu0 0.0
        %417 = vmatprep.subr.mxu0 0.0
        %418 = vmatpush1.msra.mxu0 0.0
        %419 = vmatprep.subr.mxu0 0.0
        %420 = vmatpush1.msra.mxu0 0.0
        %421 = vmatprep.subr.mxu0 0.0
        %422 = vmatpush1.msra.mxu0 0.0
        %423 = vmatprep.mubr.f32.mxu0 0.0
        %424 = vmatmul.mubr.f32.gmra.mrb[0].mxu0 %v187
        %v425 = vpop.f32.mrb[0].mxu0
        %v426 = vadd.f32 0.0, %v425
        %v427 = vpop.f32.mrb[0].mxu0
        %v428 = vadd.f32 0.0, %v427
        %429 = vmatprep.mubr.f32.mxu0 0.0
        %430 = vmatmul.mubr.f32.gmra.mrb[0].mxu0 %v190
        %v431 = vpop.f32.mrb[0].mxu0
        %v432 = vadd.f32 0.0, %v431
        %v433 = vpop.f32.mrb[0].mxu0
        %v434 = vadd.f32 0.0, %v433
        %435 = vdwg.mxu0
        %v437 = vsel %vm185, %v173, 0
        %v440 = vsel %vm185, %v174, 0
        %v442 = vsel %vm192, %v169, 0
        %444 = vmatprep.subr.mxu0 %v193
        %445 = vmatpush1.msra.mxu0 %v442
        %446 = vmatprep.subr.mxu0 0.0
        %447 = vmatpush1.msra.mxu0 0.0
        %448 = vmatprep.subr.mxu0 0.0
        %449 = vmatpush1.msra.mxu0 0.0
        %450 = vmatprep.subr.mxu0 0.0
        %451 = vmatpush1.msra.mxu0 0.0
        %452 = vmatprep.subr.mxu0 0.0
        %453 = vmatpush1.msra.mxu0 0.0
        %454 = vmatprep.subr.mxu0 0.0
        %455 = vmatpush1.msra.mxu0 0.0
        %456 = vmatprep.subr.mxu0 0.0
        %457 = vmatpush1.msra.mxu0 0.0
        %458 = vmatprep.subr.mxu0 0.0
        %459 = vmatpush1.msra.mxu0 0.0
        %460 = vmatprep.subr.mxu0 0.0
        %461 = vmatpush1.msra.mxu0 0.0
        %462 = vmatprep.subr.mxu0 0.0
        %463 = vmatpush1.msra.mxu0 0.0
        %464 = vmatprep.subr.mxu0 0.0
        %465 = vmatpush1.msra.mxu0 0.0
        %466 = vmatprep.subr.mxu0 0.0
        %467 = vmatpush1.msra.mxu0 0.0
        %468 = vmatprep.subr.mxu0 0.0
        %469 = vmatpush1.msra.mxu0 0.0
        %470 = vmatprep.subr.mxu0 0.0
        %471 = vmatpush1.msra.mxu0 0.0
        %472 = vmatprep.subr.mxu0 0.0
        %473 = vmatpush1.msra.mxu0 0.0
        %474 = vmatprep.subr.mxu0 0.0
        %475 = vmatpush1.msra.mxu0 0.0
        %476 = vmatprep.subr.mxu0 0.0
        %477 = vmatpush1.msra.mxu0 0.0
        %478 = vmatprep.subr.mxu0 0.0
        %479 = vmatpush1.msra.mxu0 0.0
        %480 = vmatprep.subr.mxu0 0.0
        %481 = vmatpush1.msra.mxu0 0.0
        %482 = vmatprep.subr.mxu0 0.0
        %483 = vmatpush1.msra.mxu0 0.0
        %484 = vmatprep.subr.mxu0 0.0
        %485 = vmatpush1.msra.mxu0 0.0
        %486 = vmatprep.subr.mxu0 0.0
        %487 = vmatpush1.msra.mxu0 0.0
        %488 = vmatprep.subr.mxu0 0.0
        %489 = vmatpush1.msra.mxu0 0.0
        %490 = vmatprep.subr.mxu0 0.0
        %491 = vmatpush1.msra.mxu0 0.0
        %492 = vmatprep.subr.mxu0 0.0
        %493 = vmatpush1.msra.mxu0 0.0
        %494 = vmatprep.subr.mxu0 0.0
        %495 = vmatpush1.msra.mxu0 0.0
        %496 = vmatprep.subr.mxu0 0.0
        %497 = vmatpush1.msra.mxu0 0.0
        %498 = vmatprep.subr.mxu0 0.0
        %499 = vmatpush1.msra.mxu0 0.0
        %500 = vmatprep.subr.mxu0 0.0
        %501 = vmatpush1.msra.mxu0 0.0
        %502 = vmatprep.subr.mxu0 0.0
        %503 = vmatpush1.msra.mxu0 0.0
        %504 = vmatprep.subr.mxu0 0.0
        %505 = vmatpush1.msra.mxu0 0.0
        %506 = vmatprep.subr.mxu0 0.0
        %507 = vmatpush1.msra.mxu0 0.0
        %508 = vmatprep.mubr.f32.mxu0 0.0
        %509 = vmatmul.mubr.f32.gmra.mrb[0].mxu0 %v437
        %v510 = vpop.f32.mrb[0].mxu0
        %v511 = vadd.f32 %v272, %v510
        %v512 = vpop.f32.mrb[0].mxu0
        %v513 = vadd.f32 %v274, %v512
        %514 = vmatprep.mubr.f32.mxu0 0.0
        %515 = vmatmul.mubr.f32.gmra.mrb[0].mxu0 %v440
        %v516 = vpop.f32.mrb[0].mxu0
        %v517 = vadd.f32 %v278, %v516
        %v518 = vpop.f32.mrb[0].mxu0
        %v519 = vadd.f32 %v280, %v518
        %520 = vdwg.mxu0
        %521 = vmatprep.subr.mxu0 %v197
        %522 = vmatpush1.msra.mxu0 %v195
        %523 = vmatprep.subr.mxu0 0.0
        %524 = vmatpush1.msra.mxu0 0.0
        %525 = vmatprep.subr.mxu0 0.0
        %526 = vmatpush1.msra.mxu0 0.0
        %527 = vmatprep.subr.mxu0 0.0
        %528 = vmatpush1.msra.mxu0 0.0
        %529 = vmatprep.subr.mxu0 0.0
        %530 = vmatpush1.msra.mxu0 0.0
        %531 = vmatprep.subr.mxu0 0.0
        %532 = vmatpush1.msra.mxu0 0.0
        %533 = vmatprep.subr.mxu0 0.0
        %534 = vmatpush1.msra.mxu0 0.0
        %535 = vmatprep.subr.mxu0 0.0
        %536 = vmatpush1.msra.mxu0 0.0
        %537 = vmatprep.subr.mxu0 0.0
        %538 = vmatpush1.msra.mxu0 0.0
        %539 = vmatprep.subr.mxu0 0.0
        %540 = vmatpush1.msra.mxu0 0.0
        %541 = vmatprep.subr.mxu0 0.0
        %542 = vmatpush1.msra.mxu0 0.0
        %543 = vmatprep.subr.mxu0 0.0
        %544 = vmatpush1.msra.mxu0 0.0
        %545 = vmatprep.subr.mxu0 0.0
        %546 = vmatpush1.msra.mxu0 0.0
        %547 = vmatprep.subr.mxu0 0.0
        %548 = vmatpush1.msra.mxu0 0.0
        %549 = vmatprep.subr.mxu0 0.0
        %550 = vmatpush1.msra.mxu0 0.0
        %551 = vmatprep.subr.mxu0 0.0
        %552 = vmatpush1.msra.mxu0 0.0
        %553 = vmatprep.subr.mxu0 0.0
        %554 = vmatpush1.msra.mxu0 0.0
        %555 = vmatprep.subr.mxu0 0.0
        %556 = vmatpush1.msra.mxu0 0.0
        %557 = vmatprep.subr.mxu0 0.0
        %558 = vmatpush1.msra.mxu0 0.0
        %559 = vmatprep.subr.mxu0 0.0
        %560 = vmatpush1.msra.mxu0 0.0
        %561 = vmatprep.subr.mxu0 0.0
        %562 = vmatpush1.msra.mxu0 0.0
        %563 = vmatprep.subr.mxu0 0.0
        %564 = vmatpush1.msra.mxu0 0.0
        %565 = vmatprep.subr.mxu0 0.0
        %566 = vmatpush1.msra.mxu0 0.0
        %567 = vmatprep.subr.mxu0 0.0
        %568 = vmatpush1.msra.mxu0 0.0
        %569 = vmatprep.subr.mxu0 0.0
        %570 = vmatpush1.msra.mxu0 0.0
        %571 = vmatprep.subr.mxu0 0.0
        %572 = vmatpush1.msra.mxu0 0.0
        %573 = vmatprep.subr.mxu0 0.0
        %574 = vmatpush1.msra.mxu0 0.0
        %575 = vmatprep.subr.mxu0 0.0
        %576 = vmatpush1.msra.mxu0 0.0
        %577 = vmatprep.subr.mxu0 0.0
        %578 = vmatpush1.msra.mxu0 0.0
        %579 = vmatprep.subr.mxu0 0.0
        %580 = vmatpush1.msra.mxu0 0.0
        %581 = vmatprep.subr.mxu0 0.0
        %582 = vmatpush1.msra.mxu0 0.0
        %583 = vmatprep.subr.mxu0 0.0
        %584 = vmatpush1.msra.mxu0 0.0
        %585 = vmatprep.mubr.f32.mxu0 0.0
        %586 = vmatmul.mubr.f32.gmra.mrb[0].mxu0 %v437
        %v587 = vpop.f32.mrb[0].mxu0
        %v588 = vadd.f32 %v349, %v587
        %v589 = vpop.f32.mrb[0].mxu0
        %v590 = vadd.f32 %v351, %v589
        %591 = vmatprep.mubr.f32.mxu0 0.0
        %592 = vmatmul.mubr.f32.gmra.mrb[0].mxu0 %v440
        %v593 = vpop.f32.mrb[0].mxu0
        %v594 = vadd.f32 %v355, %v593
        %v595 = vpop.f32.mrb[0].mxu0
        %v596 = vadd.f32 %v357, %v595
        %597 = vdwg.mxu0
        %598 = vmatprep.subr.mxu0 %v201
        %599 = vmatpush1.msra.mxu0 %v199
        %600 = vmatprep.subr.mxu0 0.0
        %601 = vmatpush1.msra.mxu0 0.0
        %602 = vmatprep.subr.mxu0 0.0
        %603 = vmatpush1.msra.mxu0 0.0
        %604 = vmatprep.subr.mxu0 0.0
        %605 = vmatpush1.msra.mxu0 0.0
        %606 = vmatprep.subr.mxu0 0.0
        %607 = vmatpush1.msra.mxu0 0.0
        %608 = vmatprep.subr.mxu0 0.0
        %609 = vmatpush1.msra.mxu0 0.0
        %610 = vmatprep.subr.mxu0 0.0
        %611 = vmatpush1.msra.mxu0 0.0
        %612 = vmatprep.subr.mxu0 0.0
        %613 = vmatpush1.msra.mxu0 0.0
        %614 = vmatprep.subr.mxu0 0.0
        %615 = vmatpush1.msra.mxu0 0.0
        %616 = vmatprep.subr.mxu0 0.0
        %617 = vmatpush1.msra.mxu0 0.0
        %618 = vmatprep.subr.mxu0 0.0
        %619 = vmatpush1.msra.mxu0 0.0
        %620 = vmatprep.subr.mxu0 0.0
        %621 = vmatpush1.msra.mxu0 0.0
        %622 = vmatprep.subr.mxu0 0.0
        %623 = vmatpush1.msra.mxu0 0.0
        %624 = vmatprep.subr.mxu0 0.0
        %625 = vmatpush1.msra.mxu0 0.0
        %626 = vmatprep.subr.mxu0 0.0
        %627 = vmatpush1.msra.mxu0 0.0
        %628 = vmatprep.subr.mxu0 0.0
        %629 = vmatpush1.msra.mxu0 0.0
        %630 = vmatprep.subr.mxu0 0.0
        %631 = vmatpush1.msra.mxu0 0.0
        %632 = vmatprep.subr.mxu0 0.0
        %633 = vmatpush1.msra.mxu0 0.0
        %634 = vmatprep.subr.mxu0 0.0
        %635 = vmatpush1.msra.mxu0 0.0
        %636 = vmatprep.subr.mxu0 0.0
        %637 = vmatpush1.msra.mxu0 0.0
        %638 = vmatprep.subr.mxu0 0.0
        %639 = vmatpush1.msra.mxu0 0.0
        %640 = vmatprep.subr.mxu0 0.0
        %641 = vmatpush1.msra.mxu0 0.0
        %642 = vmatprep.subr.mxu0 0.0
        %643 = vmatpush1.msra.mxu0 0.0
        %644 = vmatprep.subr.mxu0 0.0
        %645 = vmatpush1.msra.mxu0 0.0
        %646 = vmatprep.subr.mxu0 0.0
        %647 = vmatpush1.msra.mxu0 0.0
        %648 = vmatprep.subr.mxu0 0.0
        %649 = vmatpush1.msra.mxu0 0.0
        %650 = vmatprep.subr.mxu0 0.0
        %651 = vmatpush1.msra.mxu0 0.0
        %652 = vmatprep.subr.mxu0 0.0
        %653 = vmatpush1.msra.mxu0 0.0
        %654 = vmatprep.subr.mxu0 0.0
        %655 = vmatpush1.msra.mxu0 0.0
        %656 = vmatprep.subr.mxu0 0.0
        %657 = vmatpush1.msra.mxu0 0.0
        %658 = vmatprep.subr.mxu0 0.0
        %659 = vmatpush1.msra.mxu0 0.0
        %660 = vmatprep.subr.mxu0 0.0
        %661 = vmatpush1.msra.mxu0 0.0
        %662 = vmatprep.mubr.f32.mxu0 0.0
        %663 = vmatmul.mubr.f32.gmra.mrb[0].mxu0 %v437
        %v664 = vpop.f32.mrb[0].mxu0
        %v665 = vadd.f32 %v426, %v664
        %v666 = vpop.f32.mrb[0].mxu0
        %v667 = vadd.f32 %v428, %v666
        %668 = vmatprep.mubr.f32.mxu0 0.0
        %669 = vmatmul.mubr.f32.gmra.mrb[0].mxu0 %v440
        %v670 = vpop.f32.mrb[0].mxu0
        %v671 = vadd.f32 %v432, %v670
        %v672 = vpop.f32.mrb[0].mxu0
        %v673 = vadd.f32 %v434, %v672
        %674 = vdwg.mxu0
        %s675 = scalar_lea.vmem %s1, 32
        %v676 = vld [vmem:[%s675] sm:$0xff]
        %v677 = vld [vmem:[%s675 + $0x8] sm:$0xff]
        %v678 = vcombine.high %v172, %v172
        %v680 = vsel %vm185, %v676, 0
        %v683 = vsel %vm185, %v677, 0
        %v685 = vsel %vm192, %v678, 0
        %687 = vmatprep.subr.mxu0 %v197
        %688 = vmatpush1.msra.mxu0 %v195
        %689 = vmatprep.subr.mxu0 0.0
        %690 = vmatpush1.msra.mxu0 0.0
        %691 = vmatprep.subr.mxu0 0.0
        %692 = vmatpush1.msra.mxu0 0.0
        %693 = vmatprep.subr.mxu0 0.0
        %694 = vmatpush1.msra.mxu0 0.0
        %695 = vmatprep.subr.mxu0 0.0
        %696 = vmatpush1.msra.mxu0 0.0
        %697 = vmatprep.subr.mxu0 0.0
        %698 = vmatpush1.msra.mxu0 0.0
        %699 = vmatprep.subr.mxu0 0.0
        %700 = vmatpush1.msra.mxu0 0.0
        %701 = vmatprep.subr.mxu0 0.0
        %702 = vmatpush1.msra.mxu0 0.0
        %703 = vmatprep.subr.mxu0 0.0
        %704 = vmatpush1.msra.mxu0 0.0
        %705 = vmatprep.subr.mxu0 0.0
        %706 = vmatpush1.msra.mxu0 0.0
        %707 = vmatprep.subr.mxu0 0.0
        %708 = vmatpush1.msra.mxu0 0.0
        %709 = vmatprep.subr.mxu0 0.0
        %710 = vmatpush1.msra.mxu0 0.0
        %711 = vmatprep.subr.mxu0 0.0
        %712 = vmatpush1.msra.mxu0 0.0
        %713 = vmatprep.subr.mxu0 0.0
        %714 = vmatpush1.msra.mxu0 0.0
        %715 = vmatprep.subr.mxu0 0.0
        %716 = vmatpush1.msra.mxu0 0.0
        %717 = vmatprep.subr.mxu0 0.0
        %718 = vmatpush1.msra.mxu0 0.0
        %719 = vmatprep.subr.mxu0 0.0
        %720 = vmatpush1.msra.mxu0 0.0
        %721 = vmatprep.subr.mxu0 0.0
        %722 = vmatpush1.msra.mxu0 0.0
        %723 = vmatprep.subr.mxu0 0.0
        %724 = vmatpush1.msra.mxu0 0.0
        %725 = vmatprep.subr.mxu0 0.0
        %726 = vmatpush1.msra.mxu0 0.0
        %727 = vmatprep.subr.mxu0 0.0
        %728 = vmatpush1.msra.mxu0 0.0
        %729 = vmatprep.subr.mxu0 0.0
        %730 = vmatpush1.msra.mxu0 0.0
        %731 = vmatprep.subr.mxu0 0.0
        %732 = vmatpush1.msra.mxu0 0.0
        %733 = vmatprep.subr.mxu0 0.0
        %734 = vmatpush1.msra.mxu0 0.0
        %735 = vmatprep.subr.mxu0 0.0
        %736 = vmatpush1.msra.mxu0 0.0
        %737 = vmatprep.subr.mxu0 0.0
        %738 = vmatpush1.msra.mxu0 0.0
        %739 = vmatprep.subr.mxu0 0.0
        %740 = vmatpush1.msra.mxu0 0.0
        %741 = vmatprep.subr.mxu0 0.0
        %742 = vmatpush1.msra.mxu0 0.0
        %743 = vmatprep.subr.mxu0 0.0
        %744 = vmatpush1.msra.mxu0 0.0
        %745 = vmatprep.subr.mxu0 0.0
        %746 = vmatpush1.msra.mxu0 0.0
        %747 = vmatprep.subr.mxu0 0.0
        %748 = vmatpush1.msra.mxu0 0.0
        %749 = vmatprep.subr.mxu0 0.0
        %750 = vmatpush1.msra.mxu0 0.0
        %751 = vmatprep.mubr.f32.mxu0 0.0
        %752 = vmatmul.mubr.f32.gmra.mrb[0].mxu0 %v680
        %v753 = vpop.f32.mrb[0].mxu0
        %v754 = vadd.f32 0.0, %v753
        %v755 = vpop.f32.mrb[0].mxu0
        %v756 = vadd.f32 0.0, %v755
        %757 = vmatprep.mubr.f32.mxu0 0.0
        %758 = vmatmul.mubr.f32.gmra.mrb[0].mxu0 %v683
        %v759 = vpop.f32.mrb[0].mxu0
        %v760 = vadd.f32 0.0, %v759
        %v761 = vpop.f32.mrb[0].mxu0
        %v762 = vadd.f32 0.0, %v761
        %763 = vdwg.mxu0
        %764 = vmatprep.subr.mxu0 %v201
        %765 = vmatpush1.msra.mxu0 %v199
        %766 = vmatprep.subr.mxu0 0.0
        %767 = vmatpush1.msra.mxu0 0.0
        %768 = vmatprep.subr.mxu0 0.0
        %769 = vmatpush1.msra.mxu0 0.0
        %770 = vmatprep.subr.mxu0 0.0
        %771 = vmatpush1.msra.mxu0 0.0
        %772 = vmatprep.subr.mxu0 0.0
        %773 = vmatpush1.msra.mxu0 0.0
        %774 = vmatprep.subr.mxu0 0.0
        %775 = vmatpush1.msra.mxu0 0.0
        %776 = vmatprep.subr.mxu0 0.0
        %777 = vmatpush1.msra.mxu0 0.0
        %778 = vmatprep.subr.mxu0 0.0
        %779 = vmatpush1.msra.mxu0 0.0
        %780 = vmatprep.subr.mxu0 0.0
        %781 = vmatpush1.msra.mxu0 0.0
        %782 = vmatprep.subr.mxu0 0.0
        %783 = vmatpush1.msra.mxu0 0.0
        %784 = vmatprep.subr.mxu0 0.0
        %785 = vmatpush1.msra.mxu0 0.0
        %786 = vmatprep.subr.mxu0 0.0
        %787 = vmatpush1.msra.mxu0 0.0
        %788 = vmatprep.subr.mxu0 0.0
        %789 = vmatpush1.msra.mxu0 0.0
        %790 = vmatprep.subr.mxu0 0.0
        %791 = vmatpush1.msra.mxu0 0.0
        %792 = vmatprep.subr.mxu0 0.0
        %793 = vmatpush1.msra.mxu0 0.0
        %794 = vmatprep.subr.mxu0 0.0
        %795 = vmatpush1.msra.mxu0 0.0
        %796 = vmatprep.subr.mxu0 0.0
        %797 = vmatpush1.msra.mxu0 0.0
        %798 = vmatprep.subr.mxu0 0.0
        %799 = vmatpush1.msra.mxu0 0.0
        %800 = vmatprep.subr.mxu0 0.0
        %801 = vmatpush1.msra.mxu0 0.0
        %802 = vmatprep.subr.mxu0 0.0
        %803 = vmatpush1.msra.mxu0 0.0
        %804 = vmatprep.subr.mxu0 0.0
        %805 = vmatpush1.msra.mxu0 0.0
        %806 = vmatprep.subr.mxu0 0.0
        %807 = vmatpush1.msra.mxu0 0.0
        %808 = vmatprep.subr.mxu0 0.0
        %809 = vmatpush1.msra.mxu0 0.0
        %810 = vmatprep.subr.mxu0 0.0
        %811 = vmatpush1.msra.mxu0 0.0
        %812 = vmatprep.subr.mxu0 0.0
        %813 = vmatpush1.msra.mxu0 0.0
        %814 = vmatprep.subr.mxu0 0.0
        %815 = vmatpush1.msra.mxu0 0.0
        %816 = vmatprep.subr.mxu0 0.0
        %817 = vmatpush1.msra.mxu0 0.0
        %818 = vmatprep.subr.mxu0 0.0
        %819 = vmatpush1.msra.mxu0 0.0
        %820 = vmatprep.subr.mxu0 0.0
        %821 = vmatpush1.msra.mxu0 0.0
        %822 = vmatprep.subr.mxu0 0.0
        %823 = vmatpush1.msra.mxu0 0.0
        %824 = vmatprep.subr.mxu0 0.0
        %825 = vmatpush1.msra.mxu0 0.0
        %826 = vmatprep.subr.mxu0 0.0
        %827 = vmatpush1.msra.mxu0 0.0
        %828 = vmatprep.mubr.f32.mxu0 0.0
        %829 = vmatmul.mubr.f32.gmra.mrb[0].mxu0 %v680
        %v830 = vpop.f32.mrb[0].mxu0
        %v831 = vadd.f32 0.0, %v830
        %v832 = vpop.f32.mrb[0].mxu0
        %v833 = vadd.f32 0.0, %v832
        %834 = vmatprep.mubr.f32.mxu0 0.0
        %835 = vmatmul.mubr.f32.gmra.mrb[0].mxu0 %v683
        %v836 = vpop.f32.mrb[0].mxu0
        %v837 = vadd.f32 0.0, %v836
        %v838 = vpop.f32.mrb[0].mxu0
        %v839 = vadd.f32 0.0, %v838
        %840 = vdwg.mxu0
        %841 = vmatprep.subr.mxu0 %v685
        %842 = vmatpush1.msra.mxu0 %v203
        %843 = vmatprep.subr.mxu0 0.0
        %844 = vmatpush1.msra.mxu0 0.0
        %845 = vmatprep.subr.mxu0 0.0
        %846 = vmatpush1.msra.mxu0 0.0
        %847 = vmatprep.subr.mxu0 0.0
        %848 = vmatpush1.msra.mxu0 0.0
        %849 = vmatprep.subr.mxu0 0.0
        %850 = vmatpush1.msra.mxu0 0.0
        %851 = vmatprep.subr.mxu0 0.0
        %852 = vmatpush1.msra.mxu0 0.0
        %853 = vmatprep.subr.mxu0 0.0
        %854 = vmatpush1.msra.mxu0 0.0
        %855 = vmatprep.subr.mxu0 0.0
        %856 = vmatpush1.msra.mxu0 0.0
        %857 = vmatprep.subr.mxu0 0.0
        %858 = vmatpush1.msra.mxu0 0.0
        %859 = vmatprep.subr.mxu0 0.0
        %860 = vmatpush1.msra.mxu0 0.0
        %861 = vmatprep.subr.mxu0 0.0
        %862 = vmatpush1.msra.mxu0 0.0
        %863 = vmatprep.subr.mxu0 0.0
        %864 = vmatpush1.msra.mxu0 0.0
        %865 = vmatprep.subr.mxu0 0.0
        %866 = vmatpush1.msra.mxu0 0.0
        %867 = vmatprep.subr.mxu0 0.0
        %868 = vmatpush1.msra.mxu0 0.0
        %869 = vmatprep.subr.mxu0 0.0
        %870 = vmatpush1.msra.mxu0 0.0
        %871 = vmatprep.subr.mxu0 0.0
        %872 = vmatpush1.msra.mxu0 0.0
        %873 = vmatprep.subr.mxu0 0.0
        %874 = vmatpush1.msra.mxu0 0.0
        %875 = vmatprep.subr.mxu0 0.0
        %876 = vmatpush1.msra.mxu0 0.0
        %877 = vmatprep.subr.mxu0 0.0
        %878 = vmatpush1.msra.mxu0 0.0
        %879 = vmatprep.subr.mxu0 0.0
        %880 = vmatpush1.msra.mxu0 0.0
        %881 = vmatprep.subr.mxu0 0.0
        %882 = vmatpush1.msra.mxu0 0.0
        %883 = vmatprep.subr.mxu0 0.0
        %884 = vmatpush1.msra.mxu0 0.0
        %885 = vmatprep.subr.mxu0 0.0
        %886 = vmatpush1.msra.mxu0 0.0
        %887 = vmatprep.subr.mxu0 0.0
        %888 = vmatpush1.msra.mxu0 0.0
        %889 = vmatprep.subr.mxu0 0.0
        %890 = vmatpush1.msra.mxu0 0.0
        %891 = vmatprep.subr.mxu0 0.0
        %892 = vmatpush1.msra.mxu0 0.0
        %893 = vmatprep.subr.mxu0 0.0
        %894 = vmatpush1.msra.mxu0 0.0
        %895 = vmatprep.subr.mxu0 0.0
        %896 = vmatpush1.msra.mxu0 0.0
        %897 = vmatprep.subr.mxu0 0.0
        %898 = vmatpush1.msra.mxu0 0.0
        %899 = vmatprep.subr.mxu0 0.0
        %900 = vmatpush1.msra.mxu0 0.0
        %901 = vmatprep.subr.mxu0 0.0
        %902 = vmatpush1.msra.mxu0 0.0
        %903 = vmatprep.subr.mxu0 0.0
        %904 = vmatpush1.msra.mxu0 0.0
        %905 = vmatprep.mubr.f32.mxu0 0.0
        %906 = vmatmul.mubr.f32.gmra.mrb[0].mxu0 %v680
        %v907 = vpop.f32.mrb[0].mxu0
        %v908 = vadd.f32 0.0, %v907
        %v909 = vpop.f32.mrb[0].mxu0
        %v910 = vadd.f32 0.0, %v909
        %911 = vmatprep.mubr.f32.mxu0 0.0
        %912 = vmatmul.mubr.f32.gmra.mrb[0].mxu0 %v683
        %v913 = vpop.f32.mrb[0].mxu0
        %v914 = vadd.f32 0.0, %v913
        %v915 = vpop.f32.mrb[0].mxu0
        %v916 = vadd.f32 0.0, %v915
        %917 = vdwg.mxu0
        %v918 = vadd.f32 %v511, %v754
        %v919 = vadd.f32 %v513, %v756
        %v920 = vadd.f32 %v588, %v831
        %v921 = vadd.f32 %v590, %v833
        %v922 = vadd.f32 %v665, %v908
        %v923 = vadd.f32 %v667, %v910
        %v924 = vadd.f32 %v517, %v760
        %v925 = vadd.f32 %v519, %v762
        %v926 = vadd.f32 %v594, %v837
        %v927 = vadd.f32 %v596, %v839
        %v928 = vadd.f32 %v671, %v914
        %v929 = vadd.f32 %v673, %v916
        %v930 = vld [vmem:[%s2] sm:$0xff]
        %v931 = vld [vmem:[%s2 + $0x8] sm:$0xff]
        %933 = vset.pattern.permute.xlu0 0
        %934 = vperm.xlu0 %933, %v930
        %v935 = vpop.permute.xlu0 %934
        %938 = vset.pattern.permute.xlu0 0
        %939 = vperm.xlu0 %938, %v931
        %v940 = vpop.permute.xlu0 %939
        %v942 = vadd.f32 %v918, %v935
        %v943 = vadd.f32 %v919, %v935
        %v944 = vadd.f32 %v920, %v935
        %v945 = vadd.f32 %v921, %v935
        %v946 = vadd.f32 %v922, %v935
        %v947 = vadd.f32 %v923, %v935
        %v948 = vadd.f32 %v924, %v940
        %v949 = vadd.f32 %v925, %v940
        %v950 = vadd.f32 %v926, %v940
        %v951 = vadd.f32 %v927, %v940
        %v952 = vadd.f32 %v928, %v940
        %v953 = vadd.f32 %v929, %v940
        %v954 = vxor.u32 %v948, 2147483648
        %v955 = vxor.u32 %v949, 2147483648
        %v956 = vxor.u32 %v950, 2147483648
        %v957 = vxor.u32 %v951, 2147483648
        %v958 = vxor.u32 %v952, 2147483648
        %v959 = vxor.u32 %v953, 2147483648
        %v960 = vmul.f32 %v954, 1.442695
        %v961 = vpow.pop %v960
        %v962 = vmul.f32 %v955, 1.442695
        %v963 = vpow.pop %v962
        %v964 = vmul.f32 %v956, 1.442695
        %v965 = vpow.pop %v964
        %v966 = vmul.f32 %v957, 1.442695
        %v967 = vpow.pop %v966
        %v968 = vmul.f32 %v958, 1.442695
        %v969 = vpow.pop %v968
        %v970 = vmul.f32 %v959, 1.442695
        %v971 = vpow.pop %v970
        %v972 = vadd.f32 %v961, 1.0
        %v973 = vadd.f32 %v963, 1.0
        %v974 = vadd.f32 %v965, 1.0
        %v975 = vadd.f32 %v967, 1.0
        %v976 = vadd.f32 %v969, 1.0
        %v977 = vadd.f32 %v971, 1.0
        %v978 = vrcp.pop %v972
        %v979 = vmul.f32 1.0, %v978
        %v980 = vrcp.pop %v973
        %v981 = vmul.f32 1.0, %v980
        %v982 = vrcp.pop %v974
        %v983 = vmul.f32 1.0, %v982
        %v984 = vrcp.pop %v975
        %v985 = vmul.f32 1.0, %v984
        %v986 = vrcp.pop %v976
        %v987 = vmul.f32 1.0, %v986
        %v988 = vrcp.pop %v977
        %v989 = vmul.f32 1.0, %v988
        %v990 = vmul.f32 %v942, %v979
        %v991 = vmul.f32 %v943, %v981
        %v992 = vmul.f32 %v944, %v983
        %v993 = vmul.f32 %v945, %v985
        %v994 = vmul.f32 %v946, %v987
        %v995 = vmul.f32 %v947, %v989
        %996 = vst [vmem:[%s163] sm:$0xff] %v990
        %997 = vst [vmem:[%s163 + $0x8] sm:$0xff] %v991
        %998 = vst [vmem:[%s163 + $0x10] sm:$0xff] %v992
        %999 = vst [vmem:[%s163 + $0x18] sm:$0xff] %v993
        %1000 = vst [vmem:[%s163 + $0x20] sm:$0xff] %v994
        %1001 = vst [vmem:[%s163 + $0x28] sm:$0xff] %v995
        %s1002 = sand.u32 %s93, 1
        %s1003 = scalar_lea.sflag [#allocation3], %s1002
        %s1004 = sand.u32 %s93, 1
        %s1005 = smul.addr %s1004, 48
        %s1006 = scalar_lea.vmem [#allocation2], %s1005
        // Predicated region
        $region33: #{temporal_conv_forward.1} parent=31 // pred_check
          %p1007 = pneg %p103
        $region34: #{temporal_conv_forward.1} parent=31 // pred_check_branch
          %1009 = sbr.rel (%p1007) target = $region36
        $region35: #{temporal_conv_forward.1} parent=31 // pred_region
          %s1011 = ssub.s32 768, 768
          %1012 = vsyncadd %s1003, %s1011
          %s1013 = smul.addr %s17, 6
          %s1014 = smul.addr %s1013, 128
          %s1015 = scalar_lea.hbm %s3, %s1014
          %s1017 = sshll.u32 %s1006, 4
          %s1018 = int_to_ptr.vmem [resolvable:$true] %s1017
          %1020 = dma.vmem_to_hbm [thread:$0]  %s1018, 768, %s1015, %s1003
        $region36: #{temporal_conv_forward.1} parent=31 // pred_fallthru
          _
      $region32: #{temporal_conv_forward.1} parent=5 // pred_fallthru
        _
      %p1021 = scmp.le.s32.totalorder 2, %s12
      // Predicated region
      $region37: #{temporal_conv_forward.1} parent=5 // pred_check
        %p1022 = pneg %p1021
      $region38: #{temporal_conv_forward.1} parent=5 // pred_check_branch
        %1024 = sbr.rel (%p1022) target = $region40
      $region39: #{temporal_conv_forward.1} parent=5 // pred_region
        %s1025 = ssub.s32 %s12, 2
        // Predicated region
        $region41: #{temporal_conv_forward.1} parent=39 // pred_check
          %p1026 = pneg %p109
        $region42: #{temporal_conv_forward.1} parent=39 // pred_check_branch
          %1028 = sbr.rel (%p1026) target = $region44
        $region43: #{temporal_conv_forward.1} parent=39 // pred_region
          %s1029 = sand.u32 %s94, 1
          %s1030 = scalar_lea.sflag [#allocation3], %s1029
          %s1031 = sand.u32 %s94, 1
          %s1032 = smul.addr %s1031, 48
          %s1033 = scalar_lea.vmem [#allocation2], %s1032
          %1034 = dma.done %s1030, 768
        $region44: #{temporal_conv_forward.1} parent=39 // pred_fallthru
          _
      $region40: #{temporal_conv_forward.1} parent=5 // pred_fallthru
        _
    $region6: #{temporal_conv_forward.1} parent=1 // loop_footer
      %s16 = sadd.s32 1, %s12
    $region7: #{temporal_conv_forward.1} parent=1 // loop_footer_branch
      %11 = sbr.rel target = $region3
    $region8: #{temporal_conv_forward.1} parent=1 // loop_exit
      _
    %1035 = vsyncpa [#allocation3], 1
    %s1036 = scalar_lea.sflag [#allocation3], 1
    %1037 = vsyncpa %s1036, 1

</llo_original>
